<compile_context>
chip_gen: v6e
topology: v6e:2x2x1
jax: 0.10.0
libtpu: 0.0.40
codegen_flags: <defaults>
</compile_context>

<pallas_src>
import functools

import jax
import jax.numpy as jnp
from jax import lax
from jax.experimental import pallas as pl
from jax.experimental.pallas import tpu as pltpu


def _bway_loss_kernel(y1_ref, y2_ref, partial_ref, m_sc, l_sc, ds_sc, *, total_b):
    j = pl.program_id(1)
    nj = pl.num_programs(1)

    @pl.when(j == 0)
    def _():
        m_sc[...] = jnp.full_like(m_sc, -jnp.inf)
        l_sc[...] = jnp.zeros_like(l_sc)
        ds_sc[...] = jnp.zeros_like(ds_sc)

    # dot[i, j] = <y1[i], y2[j]>: contract the shared last (feature) axis on
    # the MXU directly (no transpose, no pre-matmul upcast), f32 accumulation.
    dot = lax.dot_general(
        y1_ref[...], y2_ref[...],
        dimension_numbers=(((1,), (1,)), ((), ())),
        preferred_element_type=jnp.float32,
    )                                                        # (tm, tn) f32

    # Online (flash-style) log-sum-exp over the column axis.
    m_prev = m_sc[...]
    m_new = jnp.maximum(m_prev, jnp.max(dot, axis=1, keepdims=True))
    alpha = jnp.exp(m_prev - m_new)
    l_sc[...] = alpha * l_sc[...] + jnp.sum(jnp.exp(dot - m_new), axis=1,
                                            keepdims=True)
    m_sc[...] = m_new

    # Running per-row sum of the raw logits (for the algebraic loss form).
    ds_sc[...] += jnp.sum(dot, axis=1, keepdims=True)

    @pl.when(j == nj - 1)
    def _():
        lse = m_sc[...] + jnp.log(l_sc[...])                 # (tm, 1)
        partial_ref[...] = jnp.float32(total_b) * lse - ds_sc[...]


def _pick_tile(n):
    for t in (512, 256, 128):
        if n % t == 0:
            return t
    return n


def bway_loss(y1, y2, *, tile_b=None):
    """y1: (B, F), y2: (B, F) -> scalar f32 loss (matches BWayLoss.forward)."""
    B, F = y1.shape
    assert y2.shape == (B, F)

    # TODO(synk): F is kept whole per tile (no tk tiling); fine for realistic
    # feature widths, revisit if F*tile_b no longer fits VMEM.
    tm = tn = tile_b if tile_b is not None else _pick_tile(B)
    assert B % tm == 0 and B % tn == 0
    grid = (B // tm, B // tn)

    kernel = functools.partial(_bway_loss_kernel, total_b=B)

    partials = pl.pallas_call(
        kernel,
        out_shape=jax.ShapeDtypeStruct((B, 1), jnp.float32),
        grid_spec=pltpu.PrefetchScalarGridSpec(
            num_scalar_prefetch=0,
            grid=grid,
            in_specs=[
                pl.BlockSpec((tm, F), lambda i, j: (i, 0)),   # y1 row block
                pl.BlockSpec((tn, F), lambda i, j: (j, 0)),   # y2 column block
            ],
            out_specs=pl.BlockSpec((tm, 1), lambda i, j: (i, 0)),
            scratch_shapes=[
                pltpu.VMEM((tm, 1), jnp.float32),   # running row max
                pltpu.VMEM((tm, 1), jnp.float32),   # running row sum-exp
                pltpu.VMEM((tm, 1), jnp.float32),   # running row-sum of dot
            ],
        ),
        compiler_params=pltpu.CompilerParams(
            dimension_semantics=("parallel", "arbitrary"),
        ),
    )(y1, y2)

    # Tiny (B, 1) final reduction; left to XLA.
    return jnp.sum(partials)


def _bway_loss_ref(y1, y2):
    dot = jnp.einsum("if,jf->ij", y1.astype(jnp.float32), y2.astype(jnp.float32))
    return -jnp.sum(jax.nn.log_softmax(dot, axis=1))


if __name__ == "__main__":
    key = jax.random.PRNGKey(0)
    k1, k2, k3, k4 = jax.random.split(key, 4)

    # Small case matching the module's (B, F) contract.
    B, F = 8, 32
    y1 = jax.random.normal(k1, (B, F), dtype=jnp.float32)
    y2 = jax.random.normal(k2, (B, F), dtype=jnp.float32)
    loss = jax.block_until_ready(bway_loss(y1, y2))
    ref = jax.block_until_ready(_bway_loss_ref(y1, y2))
    assert jnp.allclose(loss, ref, rtol=1e-5, atol=1e-2), (loss, ref)

    # Multi-tile case exercising the online-LSE accumulation across column
    # blocks and the parallel row-block axis (grid = (2, 2)).
    B2, F2 = 256, 128
    z1 = jax.random.normal(k3, (B2, F2), dtype=jnp.float32)
    z2 = jax.random.normal(k4, (B2, F2), dtype=jnp.float32)
    loss2 = jax.block_until_ready(bway_loss(z1, z2, tile_b=128))
    ref2 = jax.block_until_ready(_bway_loss_ref(z1, z2))
    assert jnp.allclose(loss2, ref2, rtol=1e-4, atol=1.0), (loss2, ref2)

    print("KERNEL_OK")
</pallas_src>

<mosaic_0001>
module attributes {stable_mosaic.version = 11 : i64} {
  func.func @_bway_loss_kernel(%arg0: i32, %arg1: i32, %arg2: memref<8x32xf32, #tpu.memory_space<vmem>>, %arg3: memref<8x32xf32, #tpu.memory_space<vmem>>, %arg4: memref<8x1xf32, #tpu.memory_space<vmem>>, %arg5: memref<8x1xf32, #tpu.memory_space<vmem>>, %arg6: memref<8x1xf32, #tpu.memory_space<vmem>>, %arg7: memref<8x1xf32, #tpu.memory_space<vmem>>) attributes {dimension_semantics = [#tpu.dimension_semantics<parallel>, #tpu.dimension_semantics<arbitrary>], iteration_bounds = array<i64: 1, 1>, scalar_prefetch = 0 : i64, scratch_operands = 3 : i64, tpu.core_type = #tpu.core_type<tc>, window_params = [{transform_indices = @transform_0, window_bounds = array<i64: 8, 32>}, {transform_indices = @transform_1, window_bounds = array<i64: 8, 32>}, {transform_indices = @transform_2, window_bounds = array<i64: 8, 1>}]} {
    %c0_i32 = arith.constant 0 : i32
    %0 = arith.cmpi eq, %arg1, %c0_i32 : i32
    %1 = arith.extui %0 : i1 to i32
    %c0_i32_0 = arith.constant 0 : i32
    %2 = arith.cmpi ne, %1, %c0_i32_0 : i32
    scf.if %2 {
      %cst_21 = arith.constant 0xFF800000 : f32
      %30 = vector.broadcast %cst_21 : f32 to vector<8x1xf32>
      %c0_22 = arith.constant 0 : index
      %c0_23 = arith.constant 0 : index
      %31 = vector.load %arg5[%c0_22, %c0_23] : memref<8x1xf32, #tpu.memory_space<vmem>>, vector<8x1xf32>
      tpu.vector_store %arg5[%c0_22, %c0_23], %30 {strides = array<i32>} : memref<8x1xf32, #tpu.memory_space<vmem>>, vector<8x1xf32>,
      %cst_24 = arith.constant 0.000000e+00 : f32
      %32 = vector.broadcast %cst_24 : f32 to vector<8x1xf32>
      %c0_25 = arith.constant 0 : index
      %c0_26 = arith.constant 0 : index
      %33 = vector.load %arg6[%c0_25, %c0_26] : memref<8x1xf32, #tpu.memory_space<vmem>>, vector<8x1xf32>
      tpu.vector_store %arg6[%c0_25, %c0_26], %32 {strides = array<i32>} : memref<8x1xf32, #tpu.memory_space<vmem>>, vector<8x1xf32>,
      %cst_27 = arith.constant 0.000000e+00 : f32
      %34 = vector.broadcast %cst_27 : f32 to vector<8x1xf32>
      %c0_28 = arith.constant 0 : index
      %c0_29 = arith.constant 0 : index
      %35 = vector.load %arg7[%c0_28, %c0_29] : memref<8x1xf32, #tpu.memory_space<vmem>>, vector<8x1xf32>
      tpu.vector_store %arg7[%c0_28, %c0_29], %34 {strides = array<i32>} : memref<8x1xf32, #tpu.memory_space<vmem>>, vector<8x1xf32>,
    } else {
    }
    %c0 = arith.constant 0 : index
    %c0_1 = arith.constant 0 : index
    %3 = vector.load %arg2[%c0, %c0_1] : memref<8x32xf32, #tpu.memory_space<vmem>>, vector<8x32xf32>
    %c0_2 = arith.constant 0 : index
    %c0_3 = arith.constant 0 : index
    %4 = vector.load %arg3[%c0_2, %c0_3] : memref<8x32xf32, #tpu.memory_space<vmem>>, vector<8x32xf32>
    %cst = arith.constant dense<0.000000e+00> : vector<8x8xf32>
    %5 = tpu.matmul %3, %4, %cst {dimension_numbers = #tpu.dot_dimension_numbers<[1], [1], [0], [0], [0, 0, 1, 0], [], []>} : vector<8x32xf32>, vector<8x32xf32>, vector<8x8xf32> -> vector<8x8xf32>
    %c0_4 = arith.constant 0 : index
    %c0_5 = arith.constant 0 : index
    %6 = vector.load %arg5[%c0_4, %c0_5] : memref<8x1xf32, #tpu.memory_space<vmem>>, vector<8x1xf32>
    %cst_6 = arith.constant dense<0xFF800000> : vector<8xf32>
    %7 = vector.multi_reduction <maximumf>, %5, %cst_6 [1] : vector<8x8xf32> to vector<8xf32>
    %8 = vector.shape_cast %7 : vector<8xf32> to vector<8x1xf32>
    %9 = arith.maximumf %6, %8 : vector<8x1xf32>
    %10 = arith.subf %6, %9 : vector<8x1xf32>
    %11 = math.exp %10 : vector<8x1xf32>
    %c0_7 = arith.constant 0 : index
    %c0_8 = arith.constant 0 : index
    %12 = vector.load %arg6[%c0_7, %c0_8] : memref<8x1xf32, #tpu.memory_space<vmem>>, vector<8x1xf32>
    %13 = arith.mulf %11, %12 : vector<8x1xf32>
    %14 = vector.broadcast %9 : vector<8x1xf32> to vector<8x8xf32>
    %15 = arith.subf %5, %14 : vector<8x8xf32>
    %16 = math.exp %15 : vector<8x8xf32>
    %cst_9 = arith.constant dense<0.000000e+00> : vector<8xf32>
    %17 = vector.multi_reduction <add>, %16, %cst_9 [1] : vector<8x8xf32> to vector<8xf32>
    %18 = vector.shape_cast %17 : vector<8xf32> to vector<8x1xf32>
    %19 = arith.addf %13, %18 : vector<8x1xf32>
    %c0_10 = arith.constant 0 : index
    %c0_11 = arith.constant 0 : index
    %20 = vector.load %arg6[%c0_10, %c0_11] : memref<8x1xf32, #tpu.memory_space<vmem>>, vector<8x1xf32>
    tpu.vector_store %arg6[%c0_10, %c0_11], %19 {strides = array<i32>} : memref<8x1xf32, #tpu.memory_space<vmem>>, vector<8x1xf32>,
    %c0_12 = arith.constant 0 : index
    %c0_13 = arith.constant 0 : index
    %21 = vector.load %arg5[%c0_12, %c0_13] : memref<8x1xf32, #tpu.memory_space<vmem>>, vector<8x1xf32>
    tpu.vector_store %arg5[%c0_12, %c0_13], %9 {strides = array<i32>} : memref<8x1xf32, #tpu.memory_space<vmem>>, vector<8x1xf32>,
    %c0_14 = arith.constant 0 : index
    %c0_15 = arith.constant 0 : index
    %22 = vector.load %arg7[%c0_14, %c0_15] : memref<8x1xf32, #tpu.memory_space<vmem>>, vector<8x1xf32>
    %cst_16 = arith.constant dense<0.000000e+00> : vector<8xf32>
    %23 = vector.multi_reduction <add>, %5, %cst_16 [1] : vector<8x8xf32> to vector<8xf32>
    %24 = vector.shape_cast %23 : vector<8xf32> to vector<8x1xf32>
    %25 = arith.addf %22, %24 : vector<8x1xf32>
    %c0_17 = arith.constant 0 : index
    %c0_18 = arith.constant 0 : index
    %26 = vector.load %arg7[%c0_17, %c0_18] : memref<8x1xf32, #tpu.memory_space<vmem>>, vector<8x1xf32>
    tpu.vector_store %arg7[%c0_17, %c0_18], %25 {strides = array<i32>} : memref<8x1xf32, #tpu.memory_space<vmem>>, vector<8x1xf32>,
    %c0_i32_19 = arith.constant 0 : i32
    %27 = arith.cmpi eq, %arg1, %c0_i32_19 : i32
    %28 = arith.extui %27 : i1 to i32
    %c0_i32_20 = arith.constant 0 : i32
    %29 = arith.cmpi ne, %28, %c0_i32_20 : i32
    scf.if %29 {
      %c0_21 = arith.constant 0 : index
      %c0_22 = arith.constant 0 : index
      %30 = vector.load %arg5[%c0_21, %c0_22] : memref<8x1xf32, #tpu.memory_space<vmem>>, vector<8x1xf32>
      %c0_23 = arith.constant 0 : index
      %c0_24 = arith.constant 0 : index
      %31 = vector.load %arg6[%c0_23, %c0_24] : memref<8x1xf32, #tpu.memory_space<vmem>>, vector<8x1xf32>
      %32 = math.log %31 : vector<8x1xf32>
      %33 = arith.addf %30, %32 : vector<8x1xf32>
      %cst_25 = arith.constant 8.000000e+00 : f32
      %34 = vector.broadcast %cst_25 : f32 to vector<8x1xf32>
      %35 = arith.mulf %34, %33 : vector<8x1xf32>
      %c0_26 = arith.constant 0 : index
      %c0_27 = arith.constant 0 : index
      %36 = vector.load %arg7[%c0_26, %c0_27] : memref<8x1xf32, #tpu.memory_space<vmem>>, vector<8x1xf32>
      %37 = arith.subf %35, %36 : vector<8x1xf32>
      %c0_28 = arith.constant 0 : index
      %c0_29 = arith.constant 0 : index
      %38 = vector.load %arg4[%c0_28, %c0_29] : memref<8x1xf32, #tpu.memory_space<vmem>>, vector<8x1xf32>
      tpu.vector_store %arg4[%c0_28, %c0_29], %37 {strides = array<i32>} : memref<8x1xf32, #tpu.memory_space<vmem>>, vector<8x1xf32>,
    } else {
    }
    return
  }
  func.func @transform_0(%arg0: i32, %arg1: i32) -> (i32, i32) {
    %c0_i32 = arith.constant 0 : i32
    %c0_i32_0 = arith.constant 0 : i32
    return %arg0, %c0_i32 : i32, i32
  }
  func.func @transform_1(%arg0: i32, %arg1: i32) -> (i32, i32) {
    %c0_i32 = arith.constant 0 : i32
    %c0_i32_0 = arith.constant 0 : i32
    return %arg1, %c0_i32 : i32, i32
  }
  func.func @transform_2(%arg0: i32, %arg1: i32) -> (i32, i32) {
    %c0_i32 = arith.constant 0 : i32
    %c0_i32_0 = arith.constant 0 : i32
    return %arg0, %c0_i32 : i32, i32
  }
}

</mosaic_0001>

<llo_original>
// kernel: tpu_custom_call.1
$region0: #{tpu_custom_call.1}
  #allocation0 [shape = 'u32[]', space=smem, size = 0x4, offset = 0x4, fixed_abs, tag = 'smem constant byte address 0x4 - core index']
  #allocation1 [shape = 'u32[144,128]{1,0:T(1,128)}', space=vmem, size = 0x12000, scoped, tag = 'internal scratch']
  #allocation2 [shape = 'f32[8,1]{1,0:T(8,128)}', space=vmem, size = 0x1000, scoped, tag = 'scratch operand']
  #allocation3 [shape = 'f32[8,1]{1,0:T(8,128)}', space=vmem, size = 0x1000, scoped, tag = 'scratch operand']
  #allocation4 [shape = 'f32[8,1]{1,0:T(8,128)}', space=vmem, size = 0x1000, scoped, tag = 'scratch operand']
  %s0 = inlined_call_operand.hbm [shape: f32[8,32], index: 0, kind: input, shape index: {}]
  %s1 = inlined_call_operand.hbm [shape: f32[8,32], index: 1, kind: input, shape index: {}]
  %s2 = inlined_call_operand.vmem [shape: f32[8,1], index: 2, kind: output, shape index: {}]
  %s3 = sld [smem:[#allocation0]]
  $region34: #{tpu_custom_call.1} parent=0
    _
  %s5 = ssub.s32 1, %s3
  %s6 = scalar_select 0, %s5, %s3
  $region1: #{tpu_custom_call.1} parent=0
    #allocation5 [shape = 'u8[4096]{0}', space=vmem, size = 0x1000, scoped, tag = 'input window, operand 0, single buffered']
    #allocation6 [shape = 's32[1]{0}', space=sflag, size = 0x4, scoped, tag = 'scoped memory for tpu_custom_call.1']
    #allocation7 [shape = 'u8[4096]{0}', space=vmem, size = 0x1000, scoped, tag = 'input window, operand 1, single buffered']
    #allocation8 [shape = 's32[1]{0}', space=sflag, size = 0x4, scoped, tag = 'scoped memory for tpu_custom_call.1']
    %7 = vsyncpa [#allocation6], 0
    %8 = vsyncpa [#allocation8], 0
    // Predicated region
    $region2: #{tpu_custom_call.1} parent=1 // pred_check
      _
    $region3: #{tpu_custom_call.1} parent=1 // pred_check_branch
      %10 = sbr.rel (0) target = $region5
    $region4: #{tpu_custom_call.1} parent=1 // pred_region
      %s12 = ssub.s32 128, 128
      %13 = vsyncadd [#allocation6], %s12
      %s15 = sshll.u32 [#allocation5], 4
      %s16 = int_to_ptr.vmem [resolvable:$true] %s15
      %18 = dma.hbm_to_vmem [thread:$0]  %s0, 128, %s16, [#allocation6]
    $region5: #{tpu_custom_call.1} parent=1 // pred_fallthru
      _
    // Predicated region
    $region6: #{tpu_custom_call.1} parent=1 // pred_check
      _
    $region7: #{tpu_custom_call.1} parent=1 // pred_check_branch
      %20 = sbr.rel (0) target = $region9
    $region8: #{tpu_custom_call.1} parent=1 // pred_region
      %s22 = ssub.s32 128, 128
      %23 = vsyncadd [#allocation8], %s22
      %s25 = sshll.u32 [#allocation7], 4
      %s26 = int_to_ptr.vmem [resolvable:$true] %s25
      %28 = dma.hbm_to_vmem [thread:$0]  %s1, 128, %s26, [#allocation8]
    $region9: #{tpu_custom_call.1} parent=1 // pred_fallthru
      _
    // Predicated region
    $region10: #{tpu_custom_call.1} parent=1 // pred_check
      _
    $region11: #{tpu_custom_call.1} parent=1 // pred_check_branch
      %30 = sbr.rel (0) target = $region13
    $region12: #{tpu_custom_call.1} parent=1 // pred_region
      %31 = dma.done [#allocation6], 128
    $region13: #{tpu_custom_call.1} parent=1 // pred_fallthru
      _
    // Predicated region
    $region14: #{tpu_custom_call.1} parent=1 // pred_check
      _
    $region15: #{tpu_custom_call.1} parent=1 // pred_check_branch
      %33 = sbr.rel (0) target = $region17
    $region16: #{tpu_custom_call.1} parent=1 // pred_region
      %34 = dma.done [#allocation8], 128
    $region17: #{tpu_custom_call.1} parent=1 // pred_fallthru
      _
    %p35 = scmp.eq.s32.totalorder 0, 0
    // Predicated region
    $region18: #{tpu_custom_call.1} parent=1 // pred_check
      %p36 = pneg %p35
    $region19: #{tpu_custom_call.1} parent=1 // pred_check_branch
      %38 = sbr.rel (%p36) target = $region21
    $region20: #{tpu_custom_call.1} parent=1 // pred_region
      %vm39 = vcmask 7168
      %40 = vst.msk [vmem:[#allocation2] sm:$0xff] %vm39, -inf
      %41 = vst.msk [vmem:[#allocation3] sm:$0xff] %vm39, 0.0
      %42 = vst.msk [vmem:[#allocation4] sm:$0xff] %vm39, 0.0
    $region21: #{tpu_custom_call.1} parent=1 // pred_fallthru
      _
    %v43 = vld [vmem:[#allocation5] sm:$0xff]
    %v44 = vld [vmem:[#allocation7] sm:$0xff]
    %vm45 = vcmask 261120
    %v47 = vsel %vm45, %v43, 0
    %v50 = vsel %vm45, %v44, 0
    %52 = vmatprep.subr.mxu0 0.0
    %53 = vmatpush1.xpose.msra.mxu0 0.0
    %54 = vmatprep.subr.mxu0 0.0
    %55 = vmatpush1.xpose.msra.mxu0 0.0
    %56 = vmatprep.subr.mxu0 0.0
    %57 = vmatpush1.xpose.msra.mxu0 0.0
    %58 = vmatprep.subr.mxu0 0.0
    %59 = vmatpush1.xpose.msra.mxu0 0.0
    %60 = vmatprep.subr.mxu0 0.0
    %61 = vmatpush1.xpose.msra.mxu0 0.0
    %62 = vmatprep.subr.mxu0 0.0
    %63 = vmatpush1.xpose.msra.mxu0 0.0
    %64 = vmatprep.subr.mxu0 0.0
    %65 = vmatpush1.xpose.msra.mxu0 0.0
    %66 = vmatprep.subr.mxu0 0.0
    %67 = vmatpush1.xpose.msra.mxu0 0.0
    %68 = vmatprep.subr.mxu0 0.0
    %69 = vmatpush1.xpose.msra.mxu0 0.0
    %70 = vmatprep.subr.mxu0 0.0
    %71 = vmatpush1.xpose.msra.mxu0 0.0
    %72 = vmatprep.subr.mxu0 0.0
    %73 = vmatpush1.xpose.msra.mxu0 0.0
    %74 = vmatprep.subr.mxu0 0.0
    %75 = vmatpush1.xpose.msra.mxu0 0.0
    %76 = vmatprep.subr.mxu0 0.0
    %77 = vmatpush1.xpose.msra.mxu0 0.0
    %78 = vmatprep.subr.mxu0 0.0
    %79 = vmatpush1.xpose.msra.mxu0 0.0
    %80 = vmatprep.subr.mxu0 0.0
    %81 = vmatpush1.xpose.msra.mxu0 0.0
    %82 = vmatprep.subr.mxu0 0.0
    %83 = vmatpush1.xpose.msra.mxu0 %v50
    %84 = vmatprep.subr.mxu0 0.0
    %85 = vmatpush2.xpose.msra.mxu0 0.0
    %86 = vmatprep.subr.mxu0 0.0
    %87 = vmatpush2.xpose.msra.mxu0 0.0
    %88 = vmatprep.subr.mxu0 0.0
    %89 = vmatpush2.xpose.msra.mxu0 0.0
    %90 = vmatprep.subr.mxu0 0.0
    %91 = vmatpush2.xpose.msra.mxu0 0.0
    %92 = vmatprep.subr.mxu0 0.0
    %93 = vmatpush2.xpose.msra.mxu0 0.0
    %94 = vmatprep.subr.mxu0 0.0
    %95 = vmatpush2.xpose.msra.mxu0 0.0
    %96 = vmatprep.subr.mxu0 0.0
    %97 = vmatpush2.xpose.msra.mxu0 0.0
    %98 = vmatprep.subr.mxu0 0.0
    %99 = vmatpush2.xpose.msra.mxu0 0.0
    %100 = vmatprep.subr.mxu0 0.0
    %101 = vmatpush2.xpose.msra.mxu0 0.0
    %102 = vmatprep.subr.mxu0 0.0
    %103 = vmatpush2.xpose.msra.mxu0 0.0
    %104 = vmatprep.subr.mxu0 0.0
    %105 = vmatpush2.xpose.msra.mxu0 0.0
    %106 = vmatprep.subr.mxu0 0.0
    %107 = vmatpush2.xpose.msra.mxu0 0.0
    %108 = vmatprep.subr.mxu0 0.0
    %109 = vmatpush2.xpose.msra.mxu0 0.0
    %110 = vmatprep.subr.mxu0 0.0
    %111 = vmatpush2.xpose.msra.mxu0 0.0
    %112 = vmatprep.subr.mxu0 0.0
    %113 = vmatpush2.xpose.msra.mxu0 0.0
    %114 = vmatprep.subr.mxu0 0.0
    %115 = vmatpush2.xpose.msra.mxu0 0.0
    %116 = vmatprep.mubr.f32.mxu0 0.0
    %117 = vmatmul.mubr.f32.gmra.mxu0 %v47
    %v118 = vpop.f32.mrf.mxu0
    %v119 = vadd.f32 0.0, %v118
    %v120 = vpop.f32.mrf.mxu0
    %121 = vdwg.mxu0
    %v122 = vld [vmem:[#allocation2] sm:$0xff]
    %vm123 = vcmask 64512
    %v124 = vsel %vm123, %v119, -inf
    %125 = vmax.xlane.f32.xlu0 %v124
    %v126 = vpop.xlane.xlu0 %125
    %v127 = vmax.f32 %v122, %v126
    %v128 = vsub.f32 %v122, %v127
    %v129 = vmul.f32 %v128, 1.442695
    %v130 = vpow.pop %v129
    %v131 = vld [vmem:[#allocation3] sm:$0xff]
    %v132 = vmul.f32 %v130, %v131
    %134 = vset.pattern.permute.xlu0 0
    %135 = vperm.xlu0 %134, %v127
    %v136 = vpop.permute.xlu0 %135
    %v138 = vsub.f32 %v119, %v136
    %v139 = vmul.f32 %v138, 1.442695
    %v140 = vpow.pop %v139
    %v141 = vsel %vm123, %v140, 0.0
    %142 = vadd.xlane.f32.xlu0 %v141
    %v143 = vpop.xlane.xlu0 %142
    %v144 = vadd.f32 %v132, %v143
    %vm145 = vcmask 7168
    %146 = vst.msk [vmem:[#allocation3] sm:$0xff] %vm145, %v144
    %147 = vst.msk [vmem:[#allocation2] sm:$0xff] %vm145, %v127
    %v148 = vld [vmem:[#allocation4] sm:$0xff]
    %v149 = vsel %vm123, %v119, 0.0
    %150 = vadd.xlane.f32.xlu0 %v149
    %v151 = vpop.xlane.xlu0 %150
    %v152 = vadd.f32 %v148, %v151
    %153 = vst.msk [vmem:[#allocation4] sm:$0xff] %vm145, %v152
    // Predicated region
    $region22: #{tpu_custom_call.1} parent=1 // pred_check
      %p154 = pneg %p35
    $region23: #{tpu_custom_call.1} parent=1 // pred_check_branch
      %156 = sbr.rel (%p154) target = $region25
    $region24: #{tpu_custom_call.1} parent=1 // pred_region
      %v157 = vld [vmem:[#allocation2] sm:$0xff]
      %v158 = vld [vmem:[#allocation3] sm:$0xff]
      %v159 = vlog2.pop %v158
      %v160 = vmul.f32 %v159, 0.6931472
      %v161 = vadd.f32 %v157, %v160
      %v162 = vmul.f32 %v161, 8.0
      %v163 = vld [vmem:[#allocation4] sm:$0xff]
      %v164 = vsub.f32 %v162, %v163
      %165 = vst.msk [vmem:[%s2] sm:$0xff] %vm145, %v164
    $region25: #{tpu_custom_call.1} parent=1 // pred_fallthru
      _
    // Predicated region
    $region26: #{tpu_custom_call.1} parent=1 // pred_check
      _
    $region27: #{tpu_custom_call.1} parent=1 // pred_check_branch
      %167 = sbr.rel (0) target = $region29
    $region28: #{tpu_custom_call.1} parent=1 // pred_region
      _
    $region29: #{tpu_custom_call.1} parent=1 // pred_fallthru
      _
    // Predicated region
    $region30: #{tpu_custom_call.1} parent=1 // pred_check
      _
    $region31: #{tpu_custom_call.1} parent=1 // pred_check_branch
      %169 = sbr.rel (0) target = $region33
    $region32: #{tpu_custom_call.1} parent=1 // pred_region
      _
    $region33: #{tpu_custom_call.1} parent=1 // pred_fallthru
      _
    %170 = vsyncpa [#allocation6], 1
    %171 = vsyncpa [#allocation8], 1

</llo_original>
